<compile_context>
chip_gen: v6e
topology: v6e:2x2x1
jax: 0.10.0
libtpu: 0.0.40
codegen_flags: <defaults>
</compile_context>

<pallas_src>
import functools

import jax
import jax.numpy as jnp
from jax import lax
from jax.experimental import pallas as pl
from jax.experimental.pallas import tpu as pltpu


def _round_up(x, m):
    return ((x + m - 1) // m) * m


def _mlp_kernel(x_ref, w_ref, b_ref, o_ref, *, dot_precision):
    # x_ref: (tm, K)  w_ref: (K, tn)  b_ref: (1, tn)  o_ref: (tm, tn)
    y = jnp.dot(x_ref[...], w_ref[...],
                preferred_element_type=jnp.float32,
                precision=dot_precision)
    y = y + b_ref[...].astype(jnp.float32)
    # Exact (erf) GELU, matching torch.nn.GELU() default numerics.
    y = 0.5 * y * (1.0 + lax.erf(y * jnp.float32(0.7071067811865476)))
    o_ref[...] = y.astype(o_ref.dtype)
    # TODO(synk): Dropout with drop=0.0 is the identity; a nonzero drop rate
    # would need pltpu.prng_seed + pltpu.prng_random_bits based masking.


def _vmem_cap_bytes():
    """Scoped-VMEM ceiling derived from the chip's physical VMEM."""
    try:
        phys = pltpu.get_tpu_info().vmem_capacity_bytes
    except Exception:
        phys = 64 << 20            # conservative default = v7x per-TensorCore
    return int(phys * 7 // 8)      # leave headroom for Mosaic internals


def mlp_forward(x, w, b, *, tm=256):
    """y = GELU(x @ w.T + b).

    x: (B, N, C) channels-last; w: (C, C) torch layout (out, in); b: (C,).
    """
    B, N, C = x.shape
    M = B * N

    x2 = x.reshape(M, C)           # free reshape, no HBM copy
    wt = w.T                       # (in, out) so the kernel computes x @ wt
    b2 = b.reshape(1, C)

    xsz = x2.dtype.itemsize
    wsz = wt.dtype.itemsize
    osz = x.dtype.itemsize
    bsz = b2.dtype.itemsize

    # Full-precision MXU path for f32 operands (tracks the f32 torch reference).
    # TODO(synk): casting f32 operands to bf16 here would be ~2-3x faster on
    # v6e/v7x MXUs at the cost of small numeric drift vs the f32 reference.
    dot_precision = lax.Precision.HIGHEST if x.dtype == jnp.float32 else None
    kernel = functools.partial(_mlp_kernel, dot_precision=dot_precision)

    # Balanced row tile: multiple of 8 (sublane), sized so the ragged tail
    # handled by the cdiv grid wastes < 8 rows of compute.
    n_row_tiles = max(1, pl.cdiv(M, tm))
    tm = min(_round_up(pl.cdiv(M, n_row_tiles), 8), _round_up(M, 8))
    n_row_tiles = pl.cdiv(M, tm)

    cap = _vmem_cap_bytes()
    headroom = 2 << 20

    cost = pl.CostEstimate(
        flops=2 * M * C * C,
        transcendentals=M * C,
        bytes_accessed=M * C * (xsz + osz) + C * C * wsz + C * bsz,
    )

    # ---------- Resident-weight path: weight/bias block index is constant, so
    # the full weight is fetched from HBM exactly once for the whole kernel.
    # NOTE: Pallas still allocates two buffers even for constant-index blocks;
    # TODO(synk): pipeline_mode=pl.Buffered(1) on the weight/bias specs would
    # halve that resident footprint (mainly relevant for very large C on v7x).
    resident_bytes = (2 * C * C * wsz        # weight (double-buffered)
                      + 2 * tm * C * xsz     # x row tiles
                      + 2 * tm * C * osz     # output tiles
                      + 2 * C * bsz          # bias
                      + headroom)

    if resident_bytes <= cap:
        vmem_limit = int(min(max(32 << 20, resident_bytes), cap))
        out = pl.pallas_call(
            kernel,
            out_shape=jax.ShapeDtypeStruct((M, C), x.dtype),
            grid_spec=pltpu.PrefetchScalarGridSpec(
                num_scalar_prefetch=0,
                grid=(n_row_tiles,),
                in_specs=[
                    pl.BlockSpec((tm, C), lambda i: (i, 0)),   # x row tile
                    pl.BlockSpec((C, C), lambda i: (0, 0)),    # resident weight
                    pl.BlockSpec((1, C), lambda i: (0, 0)),    # resident bias
                ],
                out_specs=pl.BlockSpec((tm, C), lambda i: (i, 0)),
            ),
            compiler_params=pltpu.CompilerParams(
                dimension_semantics=("parallel",),
                vmem_limit_bytes=vmem_limit,
            ),
            cost_estimate=cost,
        )(x2, wt, b2)
        return out.reshape(B, N, C)

    # ---------- Fallback for weights too large to sit resident in VMEM:
    # tile output columns with the column axis OUTERMOST so each (Cp, tn)
    # weight tile is still streamed from HBM exactly once and reused across
    # all row tiles (instead of re-streaming the weight once per row tile).
    Cp = _round_up(C, 128)                  # lane-dense column tiling
    if Cp != C:
        x2 = jnp.pad(x2, ((0, 0), (0, Cp - C)))
        wt = jnp.pad(wt, ((0, Cp - C), (0, Cp - C)))
        b2 = jnp.pad(b2, ((0, 0), (0, Cp - C)))

    def _fb_bytes(tm_, tn_):
        return (2 * Cp * tn_ * wsz + 2 * tm_ * Cp * xsz
                + 2 * tm_ * tn_ * osz + 2 * tn_ * bsz + headroom)

    tn = 128
    for cand in (512, 256, 128):
        if Cp % cand == 0 and _fb_bytes(tm, cand) <= cap:
            tn = cand
            break
    while _fb_bytes(tm, tn) > cap and tm > 8:
        tm = _round_up(tm // 2, 8)
    n_row_tiles = pl.cdiv(M, tm)
    vmem_limit = int(min(max(32 << 20, _fb_bytes(tm, tn)), cap))
    # TODO(synk): for C so large that even a (tm, Cp) x tile overflows VMEM,
    # add a K grid axis with an f32 VMEM accumulator (P3 pattern).

    out = pl.pallas_call(
        kernel,
        out_shape=jax.ShapeDtypeStruct((M, Cp), x.dtype),
        grid_spec=pltpu.PrefetchScalarGridSpec(
            num_scalar_prefetch=0,
            grid=(Cp // tn, n_row_tiles),            # columns outer, rows inner
            in_specs=[
                pl.BlockSpec((tm, Cp), lambda j, i: (i, 0)),   # x row tile
                pl.BlockSpec((Cp, tn), lambda j, i: (0, j)),   # weight col tile
                pl.BlockSpec((1, tn), lambda j, i: (0, j)),    # bias col tile
            ],
            out_specs=pl.BlockSpec((tm, tn), lambda j, i: (i, j)),
        ),
        compiler_params=pltpu.CompilerParams(
            dimension_semantics=("parallel", "parallel"),
            vmem_limit_bytes=vmem_limit,
        ),
        cost_estimate=cost,
    )(x2, wt, b2)
    if Cp != C:
        out = out[:, :C]
    return out.reshape(B, N, C)


def _reference(x, w, b):
    y = jnp.einsum("bnc,dc->bnd",
                   x.astype(jnp.float32), w.astype(jnp.float32),
                   precision="highest") + b.astype(jnp.float32)
    return 0.5 * y * (1.0 + lax.erf(y * jnp.float32(0.7071067811865476)))


if __name__ == "__main__":
    key = jax.random.PRNGKey(0)
    B, N, C = 2, 8, 32   # batch, tokens, in_features
    kx, kw, kb = jax.random.split(key, 3)

    x = jax.random.normal(kx, (B, N, C), dtype=jnp.float32)
    # Deterministic parameter init (synthetic; mimics nn.Linear's uniform range).
    bound = 1.0 / float(C) ** 0.5
    w = jax.random.uniform(kw, (C, C), jnp.float32, -bound, bound)   # (out, in)
    b = jax.random.uniform(kb, (C,), jnp.float32, -bound, bound)

    y = mlp_forward(x, w, b)
    jax.block_until_ready(y)

    y_ref = _reference(x, w, b)
    assert y.shape == y_ref.shape, "shape mismatch vs reference"
    assert jnp.allclose(y, y_ref, atol=1e-4, rtol=1e-4), "mismatch vs reference"
    print("KERNEL_OK")
</pallas_src>

<mosaic_0001>
module attributes {stable_mosaic.version = 11 : i64} {
  func.func @_mlp_kernel(%arg0: i32, %arg1: memref<16x32xf32, #tpu.memory_space<vmem>>, %arg2: memref<32x32xf32, #tpu.memory_space<vmem>>, %arg3: memref<1x32xf32, #tpu.memory_space<vmem>>, %arg4: memref<16x32xf32, #tpu.memory_space<vmem>>) attributes {dimension_semantics = [#tpu.dimension_semantics<parallel>], iteration_bounds = array<i64: 1>, scalar_prefetch = 0 : i64, scratch_operands = 0 : i64, tpu.core_type = #tpu.core_type<tc>, window_params = [{transform_indices = @transform_0, window_bounds = array<i64: 16, 32>}, {pipeline_mode = #tpu.pipeline_mode<synchronous>, transform_indices = @transform_1, window_bounds = array<i64: 32, 32>}, {pipeline_mode = #tpu.pipeline_mode<synchronous>, transform_indices = @transform_2, window_bounds = array<i64: 1, 32>}, {transform_indices = @transform_3, window_bounds = array<i64: 16, 32>}]} {
    %c0 = arith.constant 0 : index
    %c0_0 = arith.constant 0 : index
    %0 = vector.load %arg1[%c0, %c0_0] : memref<16x32xf32, #tpu.memory_space<vmem>>, vector<16x32xf32>
    %c0_1 = arith.constant 0 : index
    %c0_2 = arith.constant 0 : index
    %1 = vector.load %arg2[%c0_1, %c0_2] : memref<32x32xf32, #tpu.memory_space<vmem>>, vector<32x32xf32>
    %cst = arith.constant dense<0.000000e+00> : vector<16x32xf32>
    %2 = tpu.matmul %0, %1, %cst {dimension_numbers = #tpu.dot_dimension_numbers<[1], [0], [0], [1], [0, 0, 1, 1], [], []>, precision = #tpu.contract_precision<fp32>} : vector<16x32xf32>, vector<32x32xf32>, vector<16x32xf32> -> vector<16x32xf32>
    %c0_3 = arith.constant 0 : index
    %c0_4 = arith.constant 0 : index
    %3 = vector.load %arg3[%c0_3, %c0_4] : memref<1x32xf32, #tpu.memory_space<vmem>>, vector<1x32xf32>
    %4 = vector.broadcast %3 : vector<1x32xf32> to vector<16x32xf32>
    %5 = arith.addf %2, %4 : vector<16x32xf32>
    %cst_5 = arith.constant 5.000000e-01 : f32
    %6 = vector.broadcast %cst_5 : f32 to vector<16x32xf32>
    %7 = arith.mulf %6, %5 : vector<16x32xf32>
    %cst_6 = arith.constant 0.707106769 : f32
    %8 = vector.broadcast %cst_6 : f32 to vector<16x32xf32>
    %9 = arith.mulf %5, %8 : vector<16x32xf32>
    %10 = math.erf %9 : vector<16x32xf32>
    %cst_7 = arith.constant 1.000000e+00 : f32
    %11 = vector.broadcast %cst_7 : f32 to vector<16x32xf32>
    %12 = arith.addf %11, %10 : vector<16x32xf32>
    %13 = arith.mulf %7, %12 : vector<16x32xf32>
    %c0_8 = arith.constant 0 : index
    %c0_9 = arith.constant 0 : index
    %14 = vector.load %arg4[%c0_8, %c0_9] : memref<16x32xf32, #tpu.memory_space<vmem>>, vector<16x32xf32>
    tpu.vector_store %arg4[%c0_8, %c0_9], %13 {strides = array<i32>} : memref<16x32xf32, #tpu.memory_space<vmem>>, vector<16x32xf32>,
    return
  }
  func.func @transform_0(%arg0: i32) -> (i32, i32) {
    %c0_i32 = arith.constant 0 : i32
    %c0_i32_0 = arith.constant 0 : i32
    return %arg0, %c0_i32 : i32, i32
  }
  func.func @transform_1(%arg0: i32) -> (i32, i32) {
    %c0_i32 = arith.constant 0 : i32
    %c0_i32_0 = arith.constant 0 : i32
    %c0_i32_1 = arith.constant 0 : i32
    return %c0_i32, %c0_i32_0 : i32, i32
  }
  func.func @transform_2(%arg0: i32) -> (i32, i32) {
    %c0_i32 = arith.constant 0 : i32
    %c0_i32_0 = arith.constant 0 : i32
    %c0_i32_1 = arith.constant 0 : i32
    return %c0_i32, %c0_i32_0 : i32, i32
  }
  func.func @transform_3(%arg0: i32) -> (i32, i32) {
    %c0_i32 = arith.constant 0 : i32
    %c0_i32_0 = arith.constant 0 : i32
    return %arg0, %c0_i32 : i32, i32
  }
}

</mosaic_0001>

<llo_original>
// kernel: tpu_custom_call.1
$region0: #{tpu_custom_call.1}
  #allocation0 [shape = 'u32[]', space=smem, size = 0x4, offset = 0x4, fixed_abs, tag = 'smem constant byte address 0x4 - core index']
  #allocation1 [shape = 'u32[144,128]{1,0:T(1,128)}', space=vmem, size = 0x12000, scoped, tag = 'internal scratch']
  %s0 = inlined_call_operand.hbm [shape: f32[16,32], index: 0, kind: input, shape index: {}]
  %s1 = inlined_call_operand.hbm [shape: f32[32,32], index: 1, kind: input, shape index: {}]
  %s2 = inlined_call_operand.vmem [shape: f32[1,32], index: 2, kind: input, shape index: {}]
  %s3 = inlined_call_operand.hbm [shape: f32[16,32], index: 3, kind: output, shape index: {}]
  %s4 = sld [smem:[#allocation0]]
  $region30: #{tpu_custom_call.1} parent=0
    _
  %s6 = ssub.s32 1, %s4
  %s7 = scalar_select 0, %s6, %s4
  $region1: #{tpu_custom_call.1} parent=0
    #allocation2 [shape = 'u8[8192]{0}', space=vmem, size = 0x2000, scoped, tag = 'input window, operand 0, single buffered']
    #allocation3 [shape = 's32[1]{0}', space=sflag, size = 0x4, scoped, tag = 'scoped memory for tpu_custom_call.1']
    #allocation4 [shape = 's32[1]{0}', space=sflag, size = 0x4, scoped, tag = 'scoped memory for tpu_custom_call.1']
    #allocation5 [shape = 'u8[16384]{0}', space=vmem, size = 0x4000, scoped, tag = 'input window, operand 1, single buffered']
    #allocation6 [shape = 's32[1]{0}', space=sflag, size = 0x4, scoped, tag = 'scoped memory for tpu_custom_call.1']
    #allocation7 [shape = 'u8[8192]{0}', space=vmem, size = 0x2000, scoped, tag = 'output window, operand 0, single buffered']
    %8 = vsyncpa [#allocation3], 0
    %9 = vsyncpa [#allocation6], 0
    %10 = vsyncpa [#allocation4], 0
    // Predicated region
    $region2: #{tpu_custom_call.1} parent=1 // pred_check
      _
    $region3: #{tpu_custom_call.1} parent=1 // pred_check_branch
      %12 = sbr.rel (0) target = $region5
    $region4: #{tpu_custom_call.1} parent=1 // pred_region
      %s14 = ssub.s32 256, 256
      %15 = vsyncadd [#allocation3], %s14
      %s16 = sshll.u32 [#allocation2], 4
      %s17 = int_to_ptr.vmem [resolvable:$true] %s16
      %22 = dma.hbm_to_vmem [thread:$0]  %s0, 256, %s17, [#allocation3], 128, 128, 8
    $region5: #{tpu_custom_call.1} parent=1 // pred_fallthru
      _
    // Predicated region
    $region6: #{tpu_custom_call.1} parent=1 // pred_check
      _
    $region7: #{tpu_custom_call.1} parent=1 // pred_check_branch
      %24 = sbr.rel (0) target = $region9
    $region8: #{tpu_custom_call.1} parent=1 // pred_region
      %s26 = ssub.s32 512, 512
      %27 = vsyncadd [#allocation6], %s26
      %s28 = sshll.u32 [#allocation5], 4
      %s29 = int_to_ptr.vmem [resolvable:$true] %s28
      %34 = dma.hbm_to_vmem [thread:$0]  %s1, 512, %s29, [#allocation6], 128, 128, 8
    $region9: #{tpu_custom_call.1} parent=1 // pred_fallthru
      _
    // Predicated region
    $region10: #{tpu_custom_call.1} parent=1 // pred_check
      _
    $region11: #{tpu_custom_call.1} parent=1 // pred_check_branch
      %36 = sbr.rel (0) target = $region13
    $region12: #{tpu_custom_call.1} parent=1 // pred_region
      _
    $region13: #{tpu_custom_call.1} parent=1 // pred_fallthru
      _
    // Predicated region
    $region14: #{tpu_custom_call.1} parent=1 // pred_check
      _
    $region15: #{tpu_custom_call.1} parent=1 // pred_check_branch
      %38 = sbr.rel (0) target = $region17
    $region16: #{tpu_custom_call.1} parent=1 // pred_region
      %39 = dma.done [#allocation3], 256
    $region17: #{tpu_custom_call.1} parent=1 // pred_fallthru
      _
    // Predicated region
    $region18: #{tpu_custom_call.1} parent=1 // pred_check
      _
    $region19: #{tpu_custom_call.1} parent=1 // pred_check_branch
      %41 = sbr.rel (0) target = $region21
    $region20: #{tpu_custom_call.1} parent=1 // pred_region
      %42 = dma.done [#allocation6], 512
    $region21: #{tpu_custom_call.1} parent=1 // pred_fallthru
      _
    %v43 = vld [vmem:[#allocation2] sm:$0xff]
    %v44 = vld [vmem:[#allocation2 + $0x8] sm:$0xff]
    %v45 = vld [vmem:[#allocation5] sm:$0xff]
    %v46 = vld [vmem:[#allocation5 + $0x8] sm:$0xff]
    %v47 = vld [vmem:[#allocation5 + $0x10] sm:$0xff]
    %v48 = vld [vmem:[#allocation5 + $0x18] sm:$0xff]
    %v49 = vld [vmem:[%s2] sm:$0x1]
    %v51 = vlaneseq
    %v52 = vshrl.u32 %v51, 7
    %v53 = vsub.s32 0, %v52
    %v54 = vrot.slane %v49, %v53
    %vm56 = vcmask 261120
    %v58 = vsel %vm56, %v43, 0
    %v61 = vsel %vm56, %v44, 0
    %63 = vmatprep.subr.mxu0 0.0
    %64 = vmatpush1.msra.mxu0 0.0
    %65 = vmatprep.subr.mxu0 0.0
    %66 = vmatpush1.msra.mxu0 0.0
    %67 = vmatprep.subr.mxu0 0.0
    %68 = vmatpush1.msra.mxu0 0.0
    %69 = vmatprep.subr.mxu0 0.0
    %70 = vmatpush1.msra.mxu0 0.0
    %71 = vmatprep.subr.mxu0 0.0
    %72 = vmatpush1.msra.mxu0 0.0
    %73 = vmatprep.subr.mxu0 0.0
    %74 = vmatpush1.msra.mxu0 0.0
    %75 = vmatprep.subr.mxu0 0.0
    %76 = vmatpush1.msra.mxu0 0.0
    %77 = vmatprep.subr.mxu0 0.0
    %78 = vmatpush1.msra.mxu0 0.0
    %79 = vmatprep.subr.mxu0 0.0
    %80 = vmatpush1.msra.mxu0 0.0
    %81 = vmatprep.subr.mxu0 0.0
    %82 = vmatpush1.msra.mxu0 0.0
    %83 = vmatprep.subr.mxu0 0.0
    %84 = vmatpush1.msra.mxu0 0.0
    %85 = vmatprep.subr.mxu0 0.0
    %86 = vmatpush1.msra.mxu0 0.0
    %87 = vmatprep.subr.mxu0 0.0
    %v88 = vand.u32 %v48, 4294901760
    %89 = vmatpush1.msra.mxu0 %v88
    %90 = vmatprep.subr.mxu0 0.0
    %v91 = vand.u32 %v47, 4294901760
    %92 = vmatpush1.msra.mxu0 %v91
    %93 = vmatprep.subr.mxu0 0.0
    %v94 = vand.u32 %v46, 4294901760
    %95 = vmatpush1.msra.mxu0 %v94
    %96 = vmatprep.subr.mxu0 0.0
    %v97 = vand.u32 %v45, 4294901760
    %98 = vmatpush1.msra.mxu0 %v97
    %99 = vmatprep.subr.mxu0 0.0
    %100 = vmatpush2.msra.mxu0 0.0
    %101 = vmatprep.subr.mxu0 0.0
    %102 = vmatpush2.msra.mxu0 0.0
    %103 = vmatprep.subr.mxu0 0.0
    %104 = vmatpush2.msra.mxu0 0.0
    %105 = vmatprep.subr.mxu0 0.0
    %106 = vmatpush2.msra.mxu0 0.0
    %107 = vmatprep.subr.mxu0 0.0
    %108 = vmatpush2.msra.mxu0 0.0
    %109 = vmatprep.subr.mxu0 0.0
    %110 = vmatpush2.msra.mxu0 0.0
    %111 = vmatprep.subr.mxu0 0.0
    %112 = vmatpush2.msra.mxu0 0.0
    %113 = vmatprep.subr.mxu0 0.0
    %114 = vmatpush2.msra.mxu0 0.0
    %115 = vmatprep.subr.mxu0 0.0
    %116 = vmatpush2.msra.mxu0 0.0
    %117 = vmatprep.subr.mxu0 0.0
    %118 = vmatpush2.msra.mxu0 0.0
    %119 = vmatprep.subr.mxu0 0.0
    %120 = vmatpush2.msra.mxu0 0.0
    %121 = vmatprep.subr.mxu0 0.0
    %122 = vmatpush2.msra.mxu0 0.0
    %123 = vmatprep.subr.mxu0 0.0
    %124 = vmatpush2.msra.mxu0 0.0
    %125 = vmatprep.subr.mxu0 0.0
    %126 = vmatpush2.msra.mxu0 0.0
    %127 = vmatprep.subr.mxu0 0.0
    %128 = vmatpush2.msra.mxu0 0.0
    %129 = vmatprep.subr.mxu0 0.0
    %130 = vmatpush2.msra.mxu0 0.0
    %131 = vmatprep.mubr.f32.mxu0 0.0
    %v132 = vand.u32 %v58, 4294901760
    %v133 = vsub.f32 %v58, %v132
    %v134 = vand.u32 %v133, 4294901760
    %v135 = vsub.f32 %v133, %v134
    %v136 = vand.u32 %v135, 4294901760
    %137 = vmatmul.mubr.f32.gmra.mxu0 %v136
    %v138 = vpop.f32.mrf.mxu0
    %v139 = vadd.f32 %v54, %v138
    %v140 = vpop.f32.mrf.mxu0
    %141 = vmatprep.mubr.f32.mxu0 0.0
    %v142 = vand.u32 %v61, 4294901760
    %v143 = vsub.f32 %v61, %v142
    %v144 = vand.u32 %v143, 4294901760
    %v145 = vsub.f32 %v143, %v144
    %v146 = vand.u32 %v145, 4294901760
    %147 = vmatmul.mubr.f32.gmra.mxu0 %v146
    %v148 = vpop.f32.mrf.mxu0
    %v149 = vadd.f32 %v54, %v148
    %v150 = vpop.f32.mrf.mxu0
    %151 = vdwg.mxu0
    %152 = vmatprep.subr.mxu0 0.0
    %153 = vmatpush1.msra.mxu0 0.0
    %154 = vmatprep.subr.mxu0 0.0
    %155 = vmatpush1.msra.mxu0 0.0
    %156 = vmatprep.subr.mxu0 0.0
    %157 = vmatpush1.msra.mxu0 0.0
    %158 = vmatprep.subr.mxu0 0.0
    %159 = vmatpush1.msra.mxu0 0.0
    %160 = vmatprep.subr.mxu0 0.0
    %161 = vmatpush1.msra.mxu0 0.0
    %162 = vmatprep.subr.mxu0 0.0
    %163 = vmatpush1.msra.mxu0 0.0
    %164 = vmatprep.subr.mxu0 0.0
    %165 = vmatpush1.msra.mxu0 0.0
    %166 = vmatprep.subr.mxu0 0.0
    %167 = vmatpush1.msra.mxu0 0.0
    %168 = vmatprep.subr.mxu0 0.0
    %169 = vmatpush1.msra.mxu0 0.0
    %170 = vmatprep.subr.mxu0 0.0
    %171 = vmatpush1.msra.mxu0 0.0
    %172 = vmatprep.subr.mxu0 0.0
    %173 = vmatpush1.msra.mxu0 0.0
    %174 = vmatprep.subr.mxu0 0.0
    %175 = vmatpush1.msra.mxu0 0.0
    %176 = vmatprep.subr.mxu0 0.0
    %v177 = vand.u32 %v48, 4294901760
    %v178 = vsub.f32 %v48, %v177
    %v179 = vand.u32 %v178, 4294901760
    %v180 = vsub.f32 %v178, %v179
    %v181 = vand.u32 %v180, 4294901760
    %182 = vmatpush1.msra.mxu0 %v181
    %183 = vmatprep.subr.mxu0 0.0
    %v184 = vand.u32 %v47, 4294901760
    %v185 = vsub.f32 %v47, %v184
    %v186 = vand.u32 %v185, 4294901760
    %v187 = vsub.f32 %v185, %v186
    %v188 = vand.u32 %v187, 4294901760
    %189 = vmatpush1.msra.mxu0 %v188
    %190 = vmatprep.subr.mxu0 0.0
    %v191 = vand.u32 %v46, 4294901760
    %v192 = vsub.f32 %v46, %v191
    %v193 = vand.u32 %v192, 4294901760
    %v194 = vsub.f32 %v192, %v193
    %v195 = vand.u32 %v194, 4294901760
    %196 = vmatpush1.msra.mxu0 %v195
    %197 = vmatprep.subr.mxu0 0.0
    %v198 = vand.u32 %v45, 4294901760
    %v199 = vsub.f32 %v45, %v198
    %v200 = vand.u32 %v199, 4294901760
    %v201 = vsub.f32 %v199, %v200
    %v202 = vand.u32 %v201, 4294901760
    %203 = vmatpush1.msra.mxu0 %v202
    %204 = vmatprep.subr.mxu0 0.0
    %205 = vmatpush2.msra.mxu0 0.0
    %206 = vmatprep.subr.mxu0 0.0
    %207 = vmatpush2.msra.mxu0 0.0
    %208 = vmatprep.subr.mxu0 0.0
    %209 = vmatpush2.msra.mxu0 0.0
    %210 = vmatprep.subr.mxu0 0.0
    %211 = vmatpush2.msra.mxu0 0.0
    %212 = vmatprep.subr.mxu0 0.0
    %213 = vmatpush2.msra.mxu0 0.0
    %214 = vmatprep.subr.mxu0 0.0
    %215 = vmatpush2.msra.mxu0 0.0
    %216 = vmatprep.subr.mxu0 0.0
    %217 = vmatpush2.msra.mxu0 0.0
    %218 = vmatprep.subr.mxu0 0.0
    %219 = vmatpush2.msra.mxu0 0.0
    %220 = vmatprep.subr.mxu0 0.0
    %221 = vmatpush2.msra.mxu0 0.0
    %222 = vmatprep.subr.mxu0 0.0
    %223 = vmatpush2.msra.mxu0 0.0
    %224 = vmatprep.subr.mxu0 0.0
    %225 = vmatpush2.msra.mxu0 0.0
    %226 = vmatprep.subr.mxu0 0.0
    %227 = vmatpush2.msra.mxu0 0.0
    %228 = vmatprep.subr.mxu0 0.0
    %229 = vmatpush2.msra.mxu0 0.0
    %230 = vmatprep.subr.mxu0 0.0
    %231 = vmatpush2.msra.mxu0 0.0
    %232 = vmatprep.subr.mxu0 0.0
    %233 = vmatpush2.msra.mxu0 0.0
    %234 = vmatprep.subr.mxu0 0.0
    %235 = vmatpush2.msra.mxu0 0.0
    %236 = vmatprep.mubr.f32.mxu0 0.0
    %v237 = vand.u32 %v58, 4294901760
    %238 = vmatmul.mubr.f32.gmra.mxu0 %v237
    %v239 = vpop.f32.mrf.mxu0
    %v240 = vadd.f32 %v139, %v239
    %v241 = vpop.f32.mrf.mxu0
    %242 = vmatprep.mubr.f32.mxu0 0.0
    %v243 = vand.u32 %v61, 4294901760
    %244 = vmatmul.mubr.f32.gmra.mxu0 %v243
    %v245 = vpop.f32.mrf.mxu0
    %v246 = vadd.f32 %v149, %v245
    %v247 = vpop.f32.mrf.mxu0
    %248 = vdwg.mxu0
    %249 = vmatprep.subr.mxu0 0.0
    %250 = vmatpush1.msra.mxu0 0.0
    %251 = vmatprep.subr.mxu0 0.0
    %252 = vmatpush1.msra.mxu0 0.0
    %253 = vmatprep.subr.mxu0 0.0
    %254 = vmatpush1.msra.mxu0 0.0
    %255 = vmatprep.subr.mxu0 0.0
    %256 = vmatpush1.msra.mxu0 0.0
    %257 = vmatprep.subr.mxu0 0.0
    %258 = vmatpush1.msra.mxu0 0.0
    %259 = vmatprep.subr.mxu0 0.0
    %260 = vmatpush1.msra.mxu0 0.0
    %261 = vmatprep.subr.mxu0 0.0
    %262 = vmatpush1.msra.mxu0 0.0
    %263 = vmatprep.subr.mxu0 0.0
    %264 = vmatpush1.msra.mxu0 0.0
    %265 = vmatprep.subr.mxu0 0.0
    %266 = vmatpush1.msra.mxu0 0.0
    %267 = vmatprep.subr.mxu0 0.0
    %268 = vmatpush1.msra.mxu0 0.0
    %269 = vmatprep.subr.mxu0 0.0
    %270 = vmatpush1.msra.mxu0 0.0
    %271 = vmatprep.subr.mxu0 0.0
    %272 = vmatpush1.msra.mxu0 0.0
    %273 = vmatprep.subr.mxu0 0.0
    %v274 = vand.u32 %v48, 4294901760
    %v275 = vsub.f32 %v48, %v274
    %276 = vmatpush1.msra.mxu0 %v275
    %277 = vmatprep.subr.mxu0 0.0
    %v278 = vand.u32 %v47, 4294901760
    %v279 = vsub.f32 %v47, %v278
    %280 = vmatpush1.msra.mxu0 %v279
    %281 = vmatprep.subr.mxu0 0.0
    %v282 = vand.u32 %v46, 4294901760
    %v283 = vsub.f32 %v46, %v282
    %284 = vmatpush1.msra.mxu0 %v283
    %285 = vmatprep.subr.mxu0 0.0
    %v286 = vand.u32 %v45, 4294901760
    %v287 = vsub.f32 %v45, %v286
    %288 = vmatpush1.msra.mxu0 %v287
    %289 = vmatprep.subr.mxu0 0.0
    %290 = vmatpush2.msra.mxu0 0.0
    %291 = vmatprep.subr.mxu0 0.0
    %292 = vmatpush2.msra.mxu0 0.0
    %293 = vmatprep.subr.mxu0 0.0
    %294 = vmatpush2.msra.mxu0 0.0
    %295 = vmatprep.subr.mxu0 0.0
    %296 = vmatpush2.msra.mxu0 0.0
    %297 = vmatprep.subr.mxu0 0.0
    %298 = vmatpush2.msra.mxu0 0.0
    %299 = vmatprep.subr.mxu0 0.0
    %300 = vmatpush2.msra.mxu0 0.0
    %301 = vmatprep.subr.mxu0 0.0
    %302 = vmatpush2.msra.mxu0 0.0
    %303 = vmatprep.subr.mxu0 0.0
    %304 = vmatpush2.msra.mxu0 0.0
    %305 = vmatprep.subr.mxu0 0.0
    %306 = vmatpush2.msra.mxu0 0.0
    %307 = vmatprep.subr.mxu0 0.0
    %308 = vmatpush2.msra.mxu0 0.0
    %309 = vmatprep.subr.mxu0 0.0
    %310 = vmatpush2.msra.mxu0 0.0
    %311 = vmatprep.subr.mxu0 0.0
    %312 = vmatpush2.msra.mxu0 0.0
    %313 = vmatprep.subr.mxu0 0.0
    %314 = vmatpush2.msra.mxu0 0.0
    %315 = vmatprep.subr.mxu0 0.0
    %316 = vmatpush2.msra.mxu0 0.0
    %317 = vmatprep.subr.mxu0 0.0
    %318 = vmatpush2.msra.mxu0 0.0
    %319 = vmatprep.subr.mxu0 0.0
    %320 = vmatpush2.msra.mxu0 0.0
    %321 = vmatprep.mubr.f32.mxu0 0.0
    %v322 = vand.u32 %v58, 4294901760
    %v323 = vsub.f32 %v58, %v322
    %324 = vmatmul.mubr.f32.gmra.mxu0 %v323
    %v325 = vpop.f32.mrf.mxu0
    %v326 = vadd.f32 %v240, %v325
    %v327 = vpop.f32.mrf.mxu0
    %328 = vmatprep.mubr.f32.mxu0 0.0
    %v329 = vand.u32 %v61, 4294901760
    %v330 = vsub.f32 %v61, %v329
    %331 = vmatmul.mubr.f32.gmra.mxu0 %v330
    %v332 = vpop.f32.mrf.mxu0
    %v333 = vadd.f32 %v246, %v332
    %v334 = vpop.f32.mrf.mxu0
    %335 = vdwg.mxu0
    %336 = vmatprep.subr.mxu0 0.0
    %337 = vmatpush1.msra.mxu0 0.0
    %338 = vmatprep.subr.mxu0 0.0
    %339 = vmatpush1.msra.mxu0 0.0
    %340 = vmatprep.subr.mxu0 0.0
    %341 = vmatpush1.msra.mxu0 0.0
    %342 = vmatprep.subr.mxu0 0.0
    %343 = vmatpush1.msra.mxu0 0.0
    %344 = vmatprep.subr.mxu0 0.0
    %345 = vmatpush1.msra.mxu0 0.0
    %346 = vmatprep.subr.mxu0 0.0
    %347 = vmatpush1.msra.mxu0 0.0
    %348 = vmatprep.subr.mxu0 0.0
    %349 = vmatpush1.msra.mxu0 0.0
    %350 = vmatprep.subr.mxu0 0.0
    %351 = vmatpush1.msra.mxu0 0.0
    %352 = vmatprep.subr.mxu0 0.0
    %353 = vmatpush1.msra.mxu0 0.0
    %354 = vmatprep.subr.mxu0 0.0
    %355 = vmatpush1.msra.mxu0 0.0
    %356 = vmatprep.subr.mxu0 0.0
    %357 = vmatpush1.msra.mxu0 0.0
    %358 = vmatprep.subr.mxu0 0.0
    %359 = vmatpush1.msra.mxu0 0.0
    %360 = vmatprep.subr.mxu0 0.0
    %v361 = vand.u32 %v48, 4294901760
    %362 = vmatpush1.msra.mxu0 %v361
    %363 = vmatprep.subr.mxu0 0.0
    %v364 = vand.u32 %v47, 4294901760
    %365 = vmatpush1.msra.mxu0 %v364
    %366 = vmatprep.subr.mxu0 0.0
    %v367 = vand.u32 %v46, 4294901760
    %368 = vmatpush1.msra.mxu0 %v367
    %369 = vmatprep.subr.mxu0 0.0
    %v370 = vand.u32 %v45, 4294901760
    %371 = vmatpush1.msra.mxu0 %v370
    %372 = vmatprep.subr.mxu0 0.0
    %373 = vmatpush2.msra.mxu0 0.0
    %374 = vmatprep.subr.mxu0 0.0
    %375 = vmatpush2.msra.mxu0 0.0
    %376 = vmatprep.subr.mxu0 0.0
    %377 = vmatpush2.msra.mxu0 0.0
    %378 = vmatprep.subr.mxu0 0.0
    %379 = vmatpush2.msra.mxu0 0.0
    %380 = vmatprep.subr.mxu0 0.0
    %381 = vmatpush2.msra.mxu0 0.0
    %382 = vmatprep.subr.mxu0 0.0
    %383 = vmatpush2.msra.mxu0 0.0
    %384 = vmatprep.subr.mxu0 0.0
    %385 = vmatpush2.msra.mxu0 0.0
    %386 = vmatprep.subr.mxu0 0.0
    %387 = vmatpush2.msra.mxu0 0.0
    %388 = vmatprep.subr.mxu0 0.0
    %389 = vmatpush2.msra.mxu0 0.0
    %390 = vmatprep.subr.mxu0 0.0
    %391 = vmatpush2.msra.mxu0 0.0
    %392 = vmatprep.subr.mxu0 0.0
    %393 = vmatpush2.msra.mxu0 0.0
    %394 = vmatprep.subr.mxu0 0.0
    %395 = vmatpush2.msra.mxu0 0.0
    %396 = vmatprep.subr.mxu0 0.0
    %397 = vmatpush2.msra.mxu0 0.0
    %398 = vmatprep.subr.mxu0 0.0
    %399 = vmatpush2.msra.mxu0 0.0
    %400 = vmatprep.subr.mxu0 0.0
    %401 = vmatpush2.msra.mxu0 0.0
    %402 = vmatprep.subr.mxu0 0.0
    %403 = vmatpush2.msra.mxu0 0.0
    %404 = vmatprep.mubr.f32.mxu0 0.0
    %v405 = vand.u32 %v58, 4294901760
    %v406 = vsub.f32 %v58, %v405
    %v407 = vand.u32 %v406, 4294901760
    %408 = vmatmul.mubr.f32.gmra.mxu0 %v407
    %v409 = vpop.f32.mrf.mxu0
    %v410 = vadd.f32 %v326, %v409
    %v411 = vpop.f32.mrf.mxu0
    %412 = vmatprep.mubr.f32.mxu0 0.0
    %v413 = vand.u32 %v61, 4294901760
    %v414 = vsub.f32 %v61, %v413
    %v415 = vand.u32 %v414, 4294901760
    %416 = vmatmul.mubr.f32.gmra.mxu0 %v415
    %v417 = vpop.f32.mrf.mxu0
    %v418 = vadd.f32 %v333, %v417
    %v419 = vpop.f32.mrf.mxu0
    %420 = vdwg.mxu0
    %421 = vmatprep.subr.mxu0 0.0
    %422 = vmatpush1.msra.mxu0 0.0
    %423 = vmatprep.subr.mxu0 0.0
    %424 = vmatpush1.msra.mxu0 0.0
    %425 = vmatprep.subr.mxu0 0.0
    %426 = vmatpush1.msra.mxu0 0.0
    %427 = vmatprep.subr.mxu0 0.0
    %428 = vmatpush1.msra.mxu0 0.0
    %429 = vmatprep.subr.mxu0 0.0
    %430 = vmatpush1.msra.mxu0 0.0
    %431 = vmatprep.subr.mxu0 0.0
    %432 = vmatpush1.msra.mxu0 0.0
    %433 = vmatprep.subr.mxu0 0.0
    %434 = vmatpush1.msra.mxu0 0.0
    %435 = vmatprep.subr.mxu0 0.0
    %436 = vmatpush1.msra.mxu0 0.0
    %437 = vmatprep.subr.mxu0 0.0
    %438 = vmatpush1.msra.mxu0 0.0
    %439 = vmatprep.subr.mxu0 0.0
    %440 = vmatpush1.msra.mxu0 0.0
    %441 = vmatprep.subr.mxu0 0.0
    %442 = vmatpush1.msra.mxu0 0.0
    %443 = vmatprep.subr.mxu0 0.0
    %444 = vmatpush1.msra.mxu0 0.0
    %445 = vmatprep.subr.mxu0 0.0
    %v446 = vand.u32 %v48, 4294901760
    %v447 = vsub.f32 %v48, %v446
    %v448 = vand.u32 %v447, 4294901760
    %449 = vmatpush1.msra.mxu0 %v448
    %450 = vmatprep.subr.mxu0 0.0
    %v451 = vand.u32 %v47, 4294901760
    %v452 = vsub.f32 %v47, %v451
    %v453 = vand.u32 %v452, 4294901760
    %454 = vmatpush1.msra.mxu0 %v453
    %455 = vmatprep.subr.mxu0 0.0
    %v456 = vand.u32 %v46, 4294901760
    %v457 = vsub.f32 %v46, %v456
    %v458 = vand.u32 %v457, 4294901760
    %459 = vmatpush1.msra.mxu0 %v458
    %460 = vmatprep.subr.mxu0 0.0
    %v461 = vand.u32 %v45, 4294901760
    %v462 = vsub.f32 %v45, %v461
    %v463 = vand.u32 %v462, 4294901760
    %464 = vmatpush1.msra.mxu0 %v463
    %465 = vmatprep.subr.mxu0 0.0
    %466 = vmatpush2.msra.mxu0 0.0
    %467 = vmatprep.subr.mxu0 0.0
    %468 = vmatpush2.msra.mxu0 0.0
    %469 = vmatprep.subr.mxu0 0.0
    %470 = vmatpush2.msra.mxu0 0.0
    %471 = vmatprep.subr.mxu0 0.0
    %472 = vmatpush2.msra.mxu0 0.0
    %473 = vmatprep.subr.mxu0 0.0
    %474 = vmatpush2.msra.mxu0 0.0
    %475 = vmatprep.subr.mxu0 0.0
    %476 = vmatpush2.msra.mxu0 0.0
    %477 = vmatprep.subr.mxu0 0.0
    %478 = vmatpush2.msra.mxu0 0.0
    %479 = vmatprep.subr.mxu0 0.0
    %480 = vmatpush2.msra.mxu0 0.0
    %481 = vmatprep.subr.mxu0 0.0
    %482 = vmatpush2.msra.mxu0 0.0
    %483 = vmatprep.subr.mxu0 0.0
    %484 = vmatpush2.msra.mxu0 0.0
    %485 = vmatprep.subr.mxu0 0.0
    %486 = vmatpush2.msra.mxu0 0.0
    %487 = vmatprep.subr.mxu0 0.0
    %488 = vmatpush2.msra.mxu0 0.0
    %489 = vmatprep.subr.mxu0 0.0
    %490 = vmatpush2.msra.mxu0 0.0
    %491 = vmatprep.subr.mxu0 0.0
    %492 = vmatpush2.msra.mxu0 0.0
    %493 = vmatprep.subr.mxu0 0.0
    %494 = vmatpush2.msra.mxu0 0.0
    %495 = vmatprep.subr.mxu0 0.0
    %496 = vmatpush2.msra.mxu0 0.0
    %497 = vmatprep.mubr.f32.mxu0 0.0
    %v498 = vand.u32 %v58, 4294901760
    %499 = vmatmul.mubr.f32.gmra.mxu0 %v498
    %v500 = vpop.f32.mrf.mxu0
    %v501 = vadd.f32 %v410, %v500
    %v502 = vpop.f32.mrf.mxu0
    %503 = vmatprep.mubr.f32.mxu0 0.0
    %v504 = vand.u32 %v61, 4294901760
    %505 = vmatmul.mubr.f32.gmra.mxu0 %v504
    %v506 = vpop.f32.mrf.mxu0
    %v507 = vadd.f32 %v418, %v506
    %v508 = vpop.f32.mrf.mxu0
    %509 = vdwg.mxu0
    %510 = vmatprep.subr.mxu0 0.0
    %511 = vmatpush1.msra.mxu0 0.0
    %512 = vmatprep.subr.mxu0 0.0
    %513 = vmatpush1.msra.mxu0 0.0
    %514 = vmatprep.subr.mxu0 0.0
    %515 = vmatpush1.msra.mxu0 0.0
    %516 = vmatprep.subr.mxu0 0.0
    %517 = vmatpush1.msra.mxu0 0.0
    %518 = vmatprep.subr.mxu0 0.0
    %519 = vmatpush1.msra.mxu0 0.0
    %520 = vmatprep.subr.mxu0 0.0
    %521 = vmatpush1.msra.mxu0 0.0
    %522 = vmatprep.subr.mxu0 0.0
    %523 = vmatpush1.msra.mxu0 0.0
    %524 = vmatprep.subr.mxu0 0.0
    %525 = vmatpush1.msra.mxu0 0.0
    %526 = vmatprep.subr.mxu0 0.0
    %527 = vmatpush1.msra.mxu0 0.0
    %528 = vmatprep.subr.mxu0 0.0
    %529 = vmatpush1.msra.mxu0 0.0
    %530 = vmatprep.subr.mxu0 0.0
    %531 = vmatpush1.msra.mxu0 0.0
    %532 = vmatprep.subr.mxu0 0.0
    %533 = vmatpush1.msra.mxu0 0.0
    %534 = vmatprep.subr.mxu0 0.0
    %v535 = vand.u32 %v48, 4294901760
    %536 = vmatpush1.msra.mxu0 %v535
    %537 = vmatprep.subr.mxu0 0.0
    %v538 = vand.u32 %v47, 4294901760
    %539 = vmatpush1.msra.mxu0 %v538
    %540 = vmatprep.subr.mxu0 0.0
    %v541 = vand.u32 %v46, 4294901760
    %542 = vmatpush1.msra.mxu0 %v541
    %543 = vmatprep.subr.mxu0 0.0
    %v544 = vand.u32 %v45, 4294901760
    %545 = vmatpush1.msra.mxu0 %v544
    %546 = vmatprep.subr.mxu0 0.0
    %547 = vmatpush2.msra.mxu0 0.0
    %548 = vmatprep.subr.mxu0 0.0
    %549 = vmatpush2.msra.mxu0 0.0
    %550 = vmatprep.subr.mxu0 0.0
    %551 = vmatpush2.msra.mxu0 0.0
    %552 = vmatprep.subr.mxu0 0.0
    %553 = vmatpush2.msra.mxu0 0.0
    %554 = vmatprep.subr.mxu0 0.0
    %555 = vmatpush2.msra.mxu0 0.0
    %556 = vmatprep.subr.mxu0 0.0
    %557 = vmatpush2.msra.mxu0 0.0
    %558 = vmatprep.subr.mxu0 0.0
    %559 = vmatpush2.msra.mxu0 0.0
    %560 = vmatprep.subr.mxu0 0.0
    %561 = vmatpush2.msra.mxu0 0.0
    %562 = vmatprep.subr.mxu0 0.0
    %563 = vmatpush2.msra.mxu0 0.0
    %564 = vmatprep.subr.mxu0 0.0
    %565 = vmatpush2.msra.mxu0 0.0
    %566 = vmatprep.subr.mxu0 0.0
    %567 = vmatpush2.msra.mxu0 0.0
    %568 = vmatprep.subr.mxu0 0.0
    %569 = vmatpush2.msra.mxu0 0.0
    %570 = vmatprep.subr.mxu0 0.0
    %571 = vmatpush2.msra.mxu0 0.0
    %572 = vmatprep.subr.mxu0 0.0
    %573 = vmatpush2.msra.mxu0 0.0
    %574 = vmatprep.subr.mxu0 0.0
    %575 = vmatpush2.msra.mxu0 0.0
    %576 = vmatprep.subr.mxu0 0.0
    %577 = vmatpush2.msra.mxu0 0.0
    %578 = vmatprep.mubr.f32.mxu0 0.0
    %v579 = vand.u32 %v58, 4294901760
    %580 = vmatmul.mubr.f32.gmra.mxu0 %v579
    %v581 = vpop.f32.mrf.mxu0
    %v582 = vadd.f32 %v501, %v581
    %v583 = vpop.f32.mrf.mxu0
    %584 = vmatprep.mubr.f32.mxu0 0.0
    %v585 = vand.u32 %v61, 4294901760
    %586 = vmatmul.mubr.f32.gmra.mxu0 %v585
    %v587 = vpop.f32.mrf.mxu0
    %v588 = vadd.f32 %v507, %v587
    %v589 = vpop.f32.mrf.mxu0
    %590 = vdwg.mxu0
    %v591 = vmul.f32 %v582, 0.5
    %v592 = vmul.f32 %v588, 0.5
    %v593 = vmul.f32 %v582, 0.70710677
    %v594 = vmul.f32 %v588, 0.70710677
    %v595 = verf.f32.pop %v593
    %v596 = verf.f32.pop %v594
    %v597 = vadd.f32 %v595, 1.0
    %v598 = vadd.f32 %v596, 1.0
    %v599 = vmul.f32 %v591, %v597
    %v600 = vmul.f32 %v592, %v598
    %601 = vst.msk [vmem:[#allocation7] sm:$0xff] %vm56, %v599
    %602 = vst.msk [vmem:[#allocation7 + $0x8] sm:$0xff] %vm56, %v600
    // Predicated region
    $region22: #{tpu_custom_call.1} parent=1 // pred_check
      _
    $region23: #{tpu_custom_call.1} parent=1 // pred_check_branch
      %604 = sbr.rel (0) target = $region25
    $region24: #{tpu_custom_call.1} parent=1 // pred_region
      %s606 = ssub.s32 256, 256
      %607 = vsyncadd [#allocation4], %s606
      %s608 = sshll.u32 [#allocation7], 4
      %s609 = int_to_ptr.vmem [resolvable:$true] %s608
      %614 = dma.vmem_to_hbm [thread:$0]  %s609, 256, %s3, [#allocation4], 128, 128, 8
    $region25: #{tpu_custom_call.1} parent=1 // pred_fallthru
      _
    // Predicated region
    $region26: #{tpu_custom_call.1} parent=1 // pred_check
      _
    $region27: #{tpu_custom_call.1} parent=1 // pred_check_branch
      %616 = sbr.rel (0) target = $region29
    $region28: #{tpu_custom_call.1} parent=1 // pred_region
      %617 = dma.done [#allocation4], 256
    $region29: #{tpu_custom_call.1} parent=1 // pred_fallthru
      _
    %618 = vsyncpa [#allocation3], 1
    %619 = vsyncpa [#allocation6], 1
    %620 = vsyncpa [#allocation4], 1

</llo_original>
